<compile_context>
chip_gen: v7x
topology: tpu7x:2x2x1
jax: 0.10.0
libtpu: 0.0.40
codegen_flags: <defaults>
</compile_context>

<pallas_src>
import functools

import jax
import jax.numpy as jnp
from jax.experimental import pallas as pl
from jax.experimental.pallas import tpu as pltpu

LANE = 128


def _round_up(n, m):
    return ((n + m - 1) // m) * m


def _mlp_kernel(x_ref,
                w1_ref, b1_ref,
                w2_ref, b2_ref,
                w3_ref, b3_ref,
                w4_ref, b4_ref,
                out_ref):
    """One batch tile: 4 fused bf16 matmuls (f32 accumulate) + bias + ReLU."""
    h = x_ref[...].astype(jnp.bfloat16)                          # [tm, in_dim] bf16

    h = jnp.dot(h, w1_ref[...], preferred_element_type=jnp.float32) + b1_ref[...]
    h = jnp.maximum(h, 0.0).astype(jnp.bfloat16)                 # ReLU (dropout = identity, eval)

    h = jnp.dot(h, w2_ref[...], preferred_element_type=jnp.float32) + b2_ref[...]
    h = jnp.maximum(h, 0.0).astype(jnp.bfloat16)

    h = jnp.dot(h, w3_ref[...], preferred_element_type=jnp.float32) + b3_ref[...]
    h = jnp.maximum(h, 0.0).astype(jnp.bfloat16)

    h = jnp.dot(h, w4_ref[...], preferred_element_type=jnp.float32) + b4_ref[...]
    out_ref[...] = h.astype(out_ref.dtype)                       # [tm, out_pad] f32


def _prepare_params(params):
    """Pad weights/biases for the kernel.

    fc1: keep true input rows (x is unpadded), pad out dim to 128.
    fc2/fc3: pad both dims to 128.
    fc4: pad in dim to 128, out dim only to 16 (lean output writeback).
    Weights -> bf16, biases -> f32.
    """
    prepped = {}
    for name, (w, b) in params.items():
        kin, kout = w.shape
        kin_p = kin if name == "fc1" else _round_up(kin, LANE)
        kout_p = _round_up(kout, 16) if name == "fc4" else _round_up(kout, LANE)
        w_p = jnp.pad(w, ((0, kin_p - kin), (0, kout_p - kout))).astype(jnp.bfloat16)
        b_p = jnp.pad(b, ((0, 0), (0, kout_p - kout))).astype(jnp.float32)
        prepped[name] = (w_p, b_p)
    return prepped


def simple_nn_forward(x, params, tile_m=1024):
    """x: [B, input_dim] f32. params: dict name -> (w [in, out], b [1, out]) in true dims.

    tile_m: max batch tile (1024 on all of v5e/v6e/v7x; bigger tiles amortize
    per-grid-step overhead and VMEM use stays a few MB).
    """
    pp = _prepare_params(params)
    (w1, b1), (w2, b2), (w3, b3), (w4, b4) = (pp[n] for n in ("fc1", "fc2", "fc3", "fc4"))

    B, in_dim = x.shape
    num_classes = params["fc4"][0].shape[1]
    out_pad = w4.shape[1]

    # Batch tiling: round batch to 16 (bf16 row packing); prefer >=2 tiles so
    # both TensorCores get work on v7x, capped at tile_m rows per tile.
    bp0 = _round_up(B, 16)
    if bp0 >= 32:
        tm = min(tile_m, _round_up(bp0 // 2, 16))
    else:
        tm = bp0
    bp = _round_up(bp0, tm)
    grid = (bp // tm,)

    # Batch-only pad (no feature pad, no extra zeros materialization).
    x_p = jnp.pad(x, ((0, bp - B), (0, 0))) if bp > B else x

    def full(shape):
        return pl.BlockSpec(shape, lambda i: (0, 0))   # weights/biases stay VMEM-resident

    in_specs = [
        pl.BlockSpec((tm, in_dim), lambda i: (i, 0)),  # x: tiled over batch, true feature dim
        full(w1.shape), full(b1.shape),
        full(w2.shape), full(b2.shape),
        full(w3.shape), full(b3.shape),
        full(w4.shape), full(b4.shape),
    ]
    out_specs = pl.BlockSpec((tm, out_pad), lambda i: (i, 0))

    flops = 2 * bp * (w1.shape[0] * w1.shape[1] + w2.shape[0] * w2.shape[1]
                      + w3.shape[0] * w3.shape[1] + w4.shape[0] * w4.shape[1])
    bytes_accessed = (bp * in_dim * 4 + bp * out_pad * 4
                      + sum(w.size * 2 + b.size * 4 for w, b in pp.values()))

    out_padded = pl.pallas_call(
        _mlp_kernel,
        out_shape=jax.ShapeDtypeStruct((bp, out_pad), jnp.float32),
        grid=grid,
        in_specs=in_specs,
        out_specs=out_specs,
        compiler_params=pltpu.CompilerParams(
            dimension_semantics=("parallel",)),        # batch tiles split across TCs
        cost_estimate=pl.CostEstimate(
            flops=flops, transcendentals=0, bytes_accessed=bytes_accessed),
    )(x_p, w1, b1, w2, b2, w3, b3, w4, b4)

    return out_padded[:B, :num_classes]


def init_params(key, input_dim, num_classes):
    """Deterministic init mimicking PyTorch Linear default (U(-1/sqrt(fan_in), +)).

    Stored in TRUE (unpadded) dims, w as [in, out] (transposed vs PyTorch's [out, in]).
    """
    dims = [(input_dim, 111), (111, 100), (100, 97), (97, num_classes)]
    names = ["fc1", "fc2", "fc3", "fc4"]
    params = {}
    for name, (fan_in, fan_out) in zip(names, dims):
        key, kw, kb = jax.random.split(key, 3)
        bound = 1.0 / jnp.sqrt(jnp.float32(fan_in))
        w = jax.random.uniform(kw, (fan_in, fan_out), jnp.float32, -bound, bound)
        b = jax.random.uniform(kb, (1, fan_out), jnp.float32, -bound, bound)
        params[name] = (w, b)
    return params


if __name__ == "__main__":
    key = jax.random.PRNGKey(0)
    k_param, k_x = jax.random.split(key)

    batch, input_dim, num_classes = 8, 32, 10
    params = init_params(k_param, input_dim, num_classes)
    x = jax.random.normal(k_x, (batch, input_dim), jnp.float32)

    # Pad + pallas_call + slice fused into one jitted dispatch (latency regime).
    fwd = jax.jit(functools.partial(simple_nn_forward, params=params))
    out = fwd(x)
    jax.block_until_ready(out)

    # Sanity check against plain-JAX f32 reference of the same forward.
    def ref(x, params):
        h = x
        for name in ["fc1", "fc2", "fc3"]:
            w, b = params[name]
            h = jnp.maximum(h @ w + b, 0.0)
        w, b = params["fc4"]
        return h @ w + b

    ref_out = ref(x, params)
    assert out.shape == (batch, num_classes)
    # bf16 matmul operands (f32 accumulate) -> loosened tolerance vs f32 reference.
    assert jnp.allclose(out, ref_out, atol=5e-2, rtol=5e-2), (
        f"max abs err {jnp.max(jnp.abs(out - ref_out))}")

    print("KERNEL_OK")
</pallas_src>

<mosaic_0001>
module attributes {stable_mosaic.version = 11 : i64} {
  func.func @_mlp_kernel(%arg0: i32, %arg1: memref<16x32xf32, #tpu.memory_space<vmem>>, %arg2: memref<32x128xbf16, #tpu.memory_space<vmem>>, %arg3: memref<1x128xf32, #tpu.memory_space<vmem>>, %arg4: memref<128x128xbf16, #tpu.memory_space<vmem>>, %arg5: memref<1x128xf32, #tpu.memory_space<vmem>>, %arg6: memref<128x128xbf16, #tpu.memory_space<vmem>>, %arg7: memref<1x128xf32, #tpu.memory_space<vmem>>, %arg8: memref<128x16xbf16, #tpu.memory_space<vmem>>, %arg9: memref<1x16xf32, #tpu.memory_space<vmem>>, %arg10: memref<16x16xf32, #tpu.memory_space<vmem>>) attributes {dimension_semantics = [#tpu.dimension_semantics<parallel>], iteration_bounds = array<i64: 1>, scalar_prefetch = 0 : i64, scratch_operands = 0 : i64, tpu.core_type = #tpu.core_type<tc>, window_params = [{transform_indices = @transform_0, window_bounds = array<i64: 16, 32>}, {pipeline_mode = #tpu.pipeline_mode<synchronous>, transform_indices = @transform_1, window_bounds = array<i64: 32, 128>}, {pipeline_mode = #tpu.pipeline_mode<synchronous>, transform_indices = @transform_2, window_bounds = array<i64: 1, 128>}, {pipeline_mode = #tpu.pipeline_mode<synchronous>, transform_indices = @transform_3, window_bounds = array<i64: 128, 128>}, {pipeline_mode = #tpu.pipeline_mode<synchronous>, transform_indices = @transform_4, window_bounds = array<i64: 1, 128>}, {pipeline_mode = #tpu.pipeline_mode<synchronous>, transform_indices = @transform_5, window_bounds = array<i64: 128, 128>}, {pipeline_mode = #tpu.pipeline_mode<synchronous>, transform_indices = @transform_6, window_bounds = array<i64: 1, 128>}, {pipeline_mode = #tpu.pipeline_mode<synchronous>, transform_indices = @transform_7, window_bounds = array<i64: 128, 16>}, {pipeline_mode = #tpu.pipeline_mode<synchronous>, transform_indices = @transform_8, window_bounds = array<i64: 1, 16>}, {transform_indices = @transform_9, window_bounds = array<i64: 16, 16>}]} {
    %c0 = arith.constant 0 : index
    %c0_0 = arith.constant 0 : index
    %0 = vector.load %arg1[%c0, %c0_0] : memref<16x32xf32, #tpu.memory_space<vmem>>, vector<16x32xf32>
    %1 = arith.truncf %0 : vector<16x32xf32> to vector<16x32xbf16>
    %c0_1 = arith.constant 0 : index
    %c0_2 = arith.constant 0 : index
    %2 = vector.load %arg2[%c0_1, %c0_2] : memref<32x128xbf16, #tpu.memory_space<vmem>>, vector<32x128xbf16>
    %cst = arith.constant dense<0.000000e+00> : vector<16x128xf32>
    %3 = tpu.matmul %1, %2, %cst {dimension_numbers = #tpu.dot_dimension_numbers<[1], [0], [0], [1], [0, 0, 1, 1], [], []>} : vector<16x32xbf16>, vector<32x128xbf16>, vector<16x128xf32> -> vector<16x128xf32>
    %c0_3 = arith.constant 0 : index
    %c0_4 = arith.constant 0 : index
    %4 = vector.load %arg3[%c0_3, %c0_4] : memref<1x128xf32, #tpu.memory_space<vmem>>, vector<1x128xf32>
    %5 = vector.broadcast %4 : vector<1x128xf32> to vector<16x128xf32>
    %6 = arith.addf %3, %5 : vector<16x128xf32>
    %cst_5 = arith.constant 0.000000e+00 : f32
    %7 = vector.broadcast %cst_5 : f32 to vector<16x128xf32>
    %8 = arith.maximumf %6, %7 : vector<16x128xf32>
    %9 = arith.truncf %8 : vector<16x128xf32> to vector<16x128xbf16>
    %c0_6 = arith.constant 0 : index
    %c0_7 = arith.constant 0 : index
    %10 = vector.load %arg4[%c0_6, %c0_7] : memref<128x128xbf16, #tpu.memory_space<vmem>>, vector<128x128xbf16>
    %cst_8 = arith.constant dense<0.000000e+00> : vector<16x128xf32>
    %11 = tpu.matmul %9, %10, %cst_8 {dimension_numbers = #tpu.dot_dimension_numbers<[1], [0], [0], [1], [0, 0, 1, 1], [], []>} : vector<16x128xbf16>, vector<128x128xbf16>, vector<16x128xf32> -> vector<16x128xf32>
    %c0_9 = arith.constant 0 : index
    %c0_10 = arith.constant 0 : index
    %12 = vector.load %arg5[%c0_9, %c0_10] : memref<1x128xf32, #tpu.memory_space<vmem>>, vector<1x128xf32>
    %13 = vector.broadcast %12 : vector<1x128xf32> to vector<16x128xf32>
    %14 = arith.addf %11, %13 : vector<16x128xf32>
    %cst_11 = arith.constant 0.000000e+00 : f32
    %15 = vector.broadcast %cst_11 : f32 to vector<16x128xf32>
    %16 = arith.maximumf %14, %15 : vector<16x128xf32>
    %17 = arith.truncf %16 : vector<16x128xf32> to vector<16x128xbf16>
    %c0_12 = arith.constant 0 : index
    %c0_13 = arith.constant 0 : index
    %18 = vector.load %arg6[%c0_12, %c0_13] : memref<128x128xbf16, #tpu.memory_space<vmem>>, vector<128x128xbf16>
    %cst_14 = arith.constant dense<0.000000e+00> : vector<16x128xf32>
    %19 = tpu.matmul %17, %18, %cst_14 {dimension_numbers = #tpu.dot_dimension_numbers<[1], [0], [0], [1], [0, 0, 1, 1], [], []>} : vector<16x128xbf16>, vector<128x128xbf16>, vector<16x128xf32> -> vector<16x128xf32>
    %c0_15 = arith.constant 0 : index
    %c0_16 = arith.constant 0 : index
    %20 = vector.load %arg7[%c0_15, %c0_16] : memref<1x128xf32, #tpu.memory_space<vmem>>, vector<1x128xf32>
    %21 = vector.broadcast %20 : vector<1x128xf32> to vector<16x128xf32>
    %22 = arith.addf %19, %21 : vector<16x128xf32>
    %cst_17 = arith.constant 0.000000e+00 : f32
    %23 = vector.broadcast %cst_17 : f32 to vector<16x128xf32>
    %24 = arith.maximumf %22, %23 : vector<16x128xf32>
    %25 = arith.truncf %24 : vector<16x128xf32> to vector<16x128xbf16>
    %c0_18 = arith.constant 0 : index
    %c0_19 = arith.constant 0 : index
    %26 = vector.load %arg8[%c0_18, %c0_19] : memref<128x16xbf16, #tpu.memory_space<vmem>>, vector<128x16xbf16>
    %cst_20 = arith.constant dense<0.000000e+00> : vector<16x16xf32>
    %27 = tpu.matmul %25, %26, %cst_20 {dimension_numbers = #tpu.dot_dimension_numbers<[1], [0], [0], [1], [0, 0, 1, 1], [], []>} : vector<16x128xbf16>, vector<128x16xbf16>, vector<16x16xf32> -> vector<16x16xf32>
    %c0_21 = arith.constant 0 : index
    %c0_22 = arith.constant 0 : index
    %28 = vector.load %arg9[%c0_21, %c0_22] : memref<1x16xf32, #tpu.memory_space<vmem>>, vector<1x16xf32>
    %29 = vector.broadcast %28 : vector<1x16xf32> to vector<16x16xf32>
    %30 = arith.addf %27, %29 : vector<16x16xf32>
    %c0_23 = arith.constant 0 : index
    %c0_24 = arith.constant 0 : index
    %31 = vector.load %arg10[%c0_23, %c0_24] : memref<16x16xf32, #tpu.memory_space<vmem>>, vector<16x16xf32>
    tpu.vector_store %arg10[%c0_23, %c0_24], %30 {strides = array<i32>} : memref<16x16xf32, #tpu.memory_space<vmem>>, vector<16x16xf32>,
    return
  }
  func.func @transform_0(%arg0: i32) -> (i32, i32) {
    %c0_i32 = arith.constant 0 : i32
    %c0_i32_0 = arith.constant 0 : i32
    return %arg0, %c0_i32 : i32, i32
  }
  func.func @transform_1(%arg0: i32) -> (i32, i32) {
    %c0_i32 = arith.constant 0 : i32
    %c0_i32_0 = arith.constant 0 : i32
    %c0_i32_1 = arith.constant 0 : i32
    return %c0_i32, %c0_i32_0 : i32, i32
  }
  func.func @transform_2(%arg0: i32) -> (i32, i32) {
    %c0_i32 = arith.constant 0 : i32
    %c0_i32_0 = arith.constant 0 : i32
    %c0_i32_1 = arith.constant 0 : i32
    return %c0_i32, %c0_i32_0 : i32, i32
  }
  func.func @transform_3(%arg0: i32) -> (i32, i32) {
    %c0_i32 = arith.constant 0 : i32
    %c0_i32_0 = arith.constant 0 : i32
    %c0_i32_1 = arith.constant 0 : i32
    return %c0_i32, %c0_i32_0 : i32, i32
  }
  func.func @transform_4(%arg0: i32) -> (i32, i32) {
    %c0_i32 = arith.constant 0 : i32
    %c0_i32_0 = arith.constant 0 : i32
    %c0_i32_1 = arith.constant 0 : i32
    return %c0_i32, %c0_i32_0 : i32, i32
  }
  func.func @transform_5(%arg0: i32) -> (i32, i32) {
    %c0_i32 = arith.constant 0 : i32
    %c0_i32_0 = arith.constant 0 : i32
    %c0_i32_1 = arith.constant 0 : i32
    return %c0_i32, %c0_i32_0 : i32, i32
  }
  func.func @transform_6(%arg0: i32) -> (i32, i32) {
    %c0_i32 = arith.constant 0 : i32
    %c0_i32_0 = arith.constant 0 : i32
    %c0_i32_1 = arith.constant 0 : i32
    return %c0_i32, %c0_i32_0 : i32, i32
  }
  func.func @transform_7(%arg0: i32) -> (i32, i32) {
    %c0_i32 = arith.constant 0 : i32
    %c0_i32_0 = arith.constant 0 : i32
    %c0_i32_1 = arith.constant 0 : i32
    return %c0_i32, %c0_i32_0 : i32, i32
  }
  func.func @transform_8(%arg0: i32) -> (i32, i32) {
    %c0_i32 = arith.constant 0 : i32
    %c0_i32_0 = arith.constant 0 : i32
    %c0_i32_1 = arith.constant 0 : i32
    return %c0_i32, %c0_i32_0 : i32, i32
  }
  func.func @transform_9(%arg0: i32) -> (i32, i32) {
    %c0_i32 = arith.constant 0 : i32
    %c0_i32_0 = arith.constant 0 : i32
    return %arg0, %c0_i32 : i32, i32
  }
}

</mosaic_0001>

<llo_original>
// kernel: simple_nn_forward.1
$region0: #{simple_nn_forward.1}
  #allocation0 [shape = 'u32[]', space=smem, size = 0x4, offset = 0x4, fixed_abs, tag = 'smem constant byte address 0x4 - core index']
  #allocation1 [shape = 'u32[144,128]{1,0:T(1,128)}', space=vmem, size = 0x12000, scoped, tag = 'internal scratch']
  %s0 = inlined_call_operand.vmem [shape: f32[16,32], index: 0, kind: input, shape index: {}]
  %s1 = inlined_call_operand.hbm [shape: bf16[32,128], index: 1, kind: input, shape index: {}]
  %s2 = inlined_call_operand.vmem [shape: f32[1,128], index: 2, kind: input, shape index: {}]
  %s3 = inlined_call_operand.hbm [shape: bf16[128,128], index: 3, kind: input, shape index: {}]
  %s4 = inlined_call_operand.vmem [shape: f32[1,128], index: 4, kind: input, shape index: {}]
  %s5 = inlined_call_operand.hbm [shape: bf16[128,128], index: 5, kind: input, shape index: {}]
  %s6 = inlined_call_operand.vmem [shape: f32[1,128], index: 6, kind: input, shape index: {}]
  %s7 = inlined_call_operand.vmem [shape: bf16[128,16], index: 7, kind: input, shape index: {}]
  %s8 = inlined_call_operand.vmem [shape: f32[1,16], index: 8, kind: input, shape index: {}]
  %s9 = inlined_call_operand.vmem [shape: f32[16,16], index: 9, kind: output, shape index: {}]
  %s10 = sld [smem:[#allocation0]]
  $region58: #{simple_nn_forward.1} parent=0
    _
  %s12 = ssub.s32 1, %s10
  %s13 = scalar_select 0, %s12, %s10
  $region1: #{simple_nn_forward.1} parent=0
    #allocation2 [shape = 'u8[8192]{0}', space=vmem, size = 0x2000, scoped, tag = 'input window, operand 1, single buffered']
    #allocation3 [shape = 's32[1]{0}', space=sflag, size = 0x4, scoped, tag = 'scoped memory for simple_nn_forward.1']
    #allocation4 [shape = 'u8[32768]{0}', space=vmem, size = 0x8000, scoped, tag = 'input window, operand 3, single buffered']
    #allocation5 [shape = 's32[1]{0}', space=sflag, size = 0x4, scoped, tag = 'scoped memory for simple_nn_forward.1']
    #allocation6 [shape = 'u8[32768]{0}', space=vmem, size = 0x8000, scoped, tag = 'input window, operand 5, single buffered']
    %14 = vsyncpa [#allocation3], 0
    %15 = vsyncpa [#allocation5], 0
    // Predicated region
    $region2: #{simple_nn_forward.1} parent=1 // pred_check
      _
    $region3: #{simple_nn_forward.1} parent=1 // pred_check_branch
      %17 = sbr.rel (0) target = $region5
    $region4: #{simple_nn_forward.1} parent=1 // pred_region
      _
    $region5: #{simple_nn_forward.1} parent=1 // pred_fallthru
      _
    // Predicated region
    $region6: #{simple_nn_forward.1} parent=1 // pred_check
      _
    $region7: #{simple_nn_forward.1} parent=1 // pred_check_branch
      %19 = sbr.rel (0) target = $region9
    $region8: #{simple_nn_forward.1} parent=1 // pred_region
      %s21 = ssub.s32 256, 256
      %22 = vsyncadd [#allocation3], %s21
      %s23 = sshll.u32 [#allocation2], 4
      %s24 = int_to_ptr.vmem [resolvable:$true] %s23
      %29 = dma.hbm_to_vmem [thread:$0]  %s1, 256, %s24, [#allocation3], 64, 64, 4
    $region9: #{simple_nn_forward.1} parent=1 // pred_fallthru
      _
    // Predicated region
    $region10: #{simple_nn_forward.1} parent=1 // pred_check
      _
    $region11: #{simple_nn_forward.1} parent=1 // pred_check_branch
      %31 = sbr.rel (0) target = $region13
    $region12: #{simple_nn_forward.1} parent=1 // pred_region
      _
    $region13: #{simple_nn_forward.1} parent=1 // pred_fallthru
      _
    // Predicated region
    $region14: #{simple_nn_forward.1} parent=1 // pred_check
      _
    $region15: #{simple_nn_forward.1} parent=1 // pred_check_branch
      %33 = sbr.rel (0) target = $region17
    $region16: #{simple_nn_forward.1} parent=1 // pred_region
      %s35 = ssub.s32 1024, 1024
      %36 = vsyncadd [#allocation5], %s35
      %s37 = sshll.u32 [#allocation4], 4
      %s38 = int_to_ptr.vmem [resolvable:$true] %s37
      %43 = dma.hbm_to_vmem [thread:$0]  %s3, 1024, %s38, [#allocation5], 64, 64, 4
    $region17: #{simple_nn_forward.1} parent=1 // pred_fallthru
      _
    // Predicated region
    $region18: #{simple_nn_forward.1} parent=1 // pred_check
      _
    $region19: #{simple_nn_forward.1} parent=1 // pred_check_branch
      %45 = sbr.rel (0) target = $region21
    $region20: #{simple_nn_forward.1} parent=1 // pred_region
      _
    $region21: #{simple_nn_forward.1} parent=1 // pred_fallthru
      _
    // Predicated region
    $region22: #{simple_nn_forward.1} parent=1 // pred_check
      _
    $region23: #{simple_nn_forward.1} parent=1 // pred_check_branch
      %47 = sbr.rel (0) target = $region25
    $region24: #{simple_nn_forward.1} parent=1 // pred_region
      %s49 = ssub.s32 1024, 1024
      %50 = vsyncadd [#allocation5], %s49
      %s51 = sshll.u32 [#allocation6], 4
      %s52 = int_to_ptr.vmem [resolvable:$true] %s51
      %57 = dma.hbm_to_vmem [thread:$0]  %s5, 1024, %s52, [#allocation5], 64, 64, 4
    $region25: #{simple_nn_forward.1} parent=1 // pred_fallthru
      _
    // Predicated region
    $region26: #{simple_nn_forward.1} parent=1 // pred_check
      _
    $region27: #{simple_nn_forward.1} parent=1 // pred_check_branch
      %59 = sbr.rel (0) target = $region29
    $region28: #{simple_nn_forward.1} parent=1 // pred_region
      _
    $region29: #{simple_nn_forward.1} parent=1 // pred_fallthru
      _
    // Predicated region
    $region30: #{simple_nn_forward.1} parent=1 // pred_check
      _
    $region31: #{simple_nn_forward.1} parent=1 // pred_check_branch
      %61 = sbr.rel (0) target = $region33
    $region32: #{simple_nn_forward.1} parent=1 // pred_region
      _
    $region33: #{simple_nn_forward.1} parent=1 // pred_fallthru
      _
    // Predicated region
    $region34: #{simple_nn_forward.1} parent=1 // pred_check
      _
    $region35: #{simple_nn_forward.1} parent=1 // pred_check_branch
      %63 = sbr.rel (0) target = $region37
    $region36: #{simple_nn_forward.1} parent=1 // pred_region
      _
    $region37: #{simple_nn_forward.1} parent=1 // pred_fallthru
      _
    // Predicated region
    $region38: #{simple_nn_forward.1} parent=1 // pred_check
      _
    $region39: #{simple_nn_forward.1} parent=1 // pred_check_branch
      %65 = sbr.rel (0) target = $region41
    $region40: #{simple_nn_forward.1} parent=1 // pred_region
      %66 = dma.done [#allocation3], 256
    $region41: #{simple_nn_forward.1} parent=1 // pred_fallthru
      _
    // Predicated region
    $region42: #{simple_nn_forward.1} parent=1 // pred_check
      _
    $region43: #{simple_nn_forward.1} parent=1 // pred_check_branch
      %68 = sbr.rel (0) target = $region45
    $region44: #{simple_nn_forward.1} parent=1 // pred_region
      %69 = dma.done [#allocation5], 1024
    $region45: #{simple_nn_forward.1} parent=1 // pred_fallthru
      _
    // Predicated region
    $region46: #{simple_nn_forward.1} parent=1 // pred_check
      _
    $region47: #{simple_nn_forward.1} parent=1 // pred_check_branch
      %71 = sbr.rel (0) target = $region49
    $region48: #{simple_nn_forward.1} parent=1 // pred_region
      %72 = dma.done [#allocation5], 1024
    $region49: #{simple_nn_forward.1} parent=1 // pred_fallthru
      _
    %v74 = vld [vmem:[%s0] sm:$0xff]
    %v75 = vld [vmem:[%s0 + $0x8] sm:$0xff]
    %v76 = vpack.c.bf16 %v75, %v74
    %v77 = vld [vmem:[#allocation2] sm:$0xf]
    %v78 = vld [vmem:[#allocation2 + $0x4] sm:$0xf]
    %v79 = vld [vmem:[#allocation2 + $0x8] sm:$0xf]
    %v80 = vld [vmem:[#allocation2 + $0xc] sm:$0xf]
    %v81 = vld [vmem:[%s2] sm:$0x1]
    %v83 = vlaneseq
    %v84 = vshrl.u32 %v83, 7
    %v85 = vsub.s32 0, %v84
    %v86 = vrot.slane %v81, %v85
    %v92 = vunpack.c.l.b16 %v77
    %v93 = vunpack.c.l.b16 %v78
    %v94 = vunpack.c.l.b16 %v79
    %v95 = vunpack.c.l.b16 %v80
    %v96 = vpack.c.b16 %v93, %v92
    %v97 = vpack.c.b16 %v95, %v94
    %vm100 = vcmask 261120
    %v102 = vsel %vm100, %v76, 0
    %104 = vmatprep.subr.bf16.mxu0 0
    %105 = vmatpush1.bf16.msra.mxu0 %v96
    %106 = vmatprep.subr.bf16.mxu0 0
    %107 = vmatpush1.bf16.msra.mxu0 %v97
    %108 = vmatprep.subr.bf16.mxu0 0
    %109 = vmatpush1.bf16.msra.mxu0 0
    %110 = vmatprep.subr.bf16.mxu0 0
    %111 = vmatpush1.bf16.msra.mxu0 0
    %112 = vmatprep.subr.bf16.mxu0 0
    %113 = vmatpush1.bf16.msra.mxu0 0
    %114 = vmatprep.subr.bf16.mxu0 0
    %115 = vmatpush1.bf16.msra.mxu0 0
    %116 = vmatprep.subr.bf16.mxu0 0
    %117 = vmatpush1.bf16.msra.mxu0 0
    %118 = vmatprep.subr.bf16.mxu0 0
    %119 = vmatpush1.bf16.msra.mxu0 0
    %120 = vmatprep.subr.bf16.mxu0 0
    %121 = vmatpush1.bf16.msra.mxu0 0
    %122 = vmatprep.subr.bf16.mxu0 0
    %123 = vmatpush1.bf16.msra.mxu0 0
    %124 = vmatprep.subr.bf16.mxu0 0
    %125 = vmatpush1.bf16.msra.mxu0 0
    %126 = vmatprep.subr.bf16.mxu0 0
    %127 = vmatpush1.bf16.msra.mxu0 0
    %128 = vmatprep.subr.bf16.mxu0 0
    %129 = vmatpush1.bf16.msra.mxu0 0
    %130 = vmatprep.subr.bf16.mxu0 0
    %131 = vmatpush1.bf16.msra.mxu0 0
    %132 = vmatprep.subr.bf16.mxu0 0
    %133 = vmatpush1.bf16.msra.mxu0 0
    %134 = vmatprep.subr.bf16.mxu0 0
    %135 = vmatpush1.bf16.msra.mxu0 0
    %136 = vmatprep.mubr.bf16.mxu0 0
    %137 = vmatmul.mubr.bf16.gmra.mrb[0].mxu0 %v102
    %v138 = vpop.f32.mrb[0].mxu0
    %v139 = vadd.f32 %v86, %v138
    %v140 = vpop.f32.mrb[0].mxu0
    %v141 = vpop.f32.mrb[0].mxu0
    %v142 = vadd.f32 %v86, %v141
    %v143 = vpop.f32.mrb[0].mxu0
    %144 = vdwg.mxu0
    %v145 = vmax.f32 %v139, 0.0
    %v146 = vmax.f32 %v142, 0.0
    %v147 = vpack.c.bf16 %v146, %v145
    %v148 = vld [vmem:[#allocation4] sm:$0xf]
    %v149 = vld [vmem:[#allocation4 + $0x4] sm:$0xf]
    %v150 = vld [vmem:[#allocation4 + $0x8] sm:$0xf]
    %v151 = vld [vmem:[#allocation4 + $0xc] sm:$0xf]
    %v152 = vld [vmem:[#allocation4 + $0x10] sm:$0xf]
    %v153 = vld [vmem:[#allocation4 + $0x14] sm:$0xf]
    %v154 = vld [vmem:[#allocation4 + $0x18] sm:$0xf]
    %v155 = vld [vmem:[#allocation4 + $0x1c] sm:$0xf]
    %v156 = vld [vmem:[#allocation4 + $0x20] sm:$0xf]
    %v157 = vld [vmem:[#allocation4 + $0x24] sm:$0xf]
    %v158 = vld [vmem:[#allocation4 + $0x28] sm:$0xf]
    %v159 = vld [vmem:[#allocation4 + $0x2c] sm:$0xf]
    %v160 = vld [vmem:[#allocation4 + $0x30] sm:$0xf]
    %v161 = vld [vmem:[#allocation4 + $0x34] sm:$0xf]
    %v162 = vld [vmem:[#allocation4 + $0x38] sm:$0xf]
    %v163 = vld [vmem:[#allocation4 + $0x3c] sm:$0xf]
    %v164 = vld [vmem:[%s4] sm:$0x1]
    %v166 = vlaneseq
    %v167 = vshrl.u32 %v166, 7
    %v168 = vsub.s32 0, %v167
    %v169 = vrot.slane %v164, %v168
    %v187 = vunpack.c.l.b16 %v148
    %v188 = vunpack.c.l.b16 %v149
    %v189 = vunpack.c.l.b16 %v150
    %v190 = vunpack.c.l.b16 %v151
    %v191 = vunpack.c.l.b16 %v152
    %v192 = vunpack.c.l.b16 %v153
    %v193 = vunpack.c.l.b16 %v154
    %v194 = vunpack.c.l.b16 %v155
    %v195 = vunpack.c.l.b16 %v156
    %v196 = vunpack.c.l.b16 %v157
    %v197 = vunpack.c.l.b16 %v158
    %v198 = vunpack.c.l.b16 %v159
    %v199 = vunpack.c.l.b16 %v160
    %v200 = vunpack.c.l.b16 %v161
    %v201 = vunpack.c.l.b16 %v162
    %v202 = vunpack.c.l.b16 %v163
    %v203 = vpack.c.b16 %v188, %v187
    %v204 = vpack.c.b16 %v190, %v189
    %v205 = vpack.c.b16 %v192, %v191
    %v206 = vpack.c.b16 %v194, %v193
    %v207 = vpack.c.b16 %v196, %v195
    %v208 = vpack.c.b16 %v198, %v197
    %v209 = vpack.c.b16 %v200, %v199
    %v210 = vpack.c.b16 %v202, %v201
    %219 = vmatprep.subr.bf16.mxu0 0
    %220 = vmatpush1.bf16.msra.mxu0 %v203
    %221 = vmatprep.subr.bf16.mxu0 0
    %222 = vmatpush1.bf16.msra.mxu0 %v204
    %223 = vmatprep.subr.bf16.mxu0 0
    %224 = vmatpush1.bf16.msra.mxu0 %v205
    %225 = vmatprep.subr.bf16.mxu0 0
    %226 = vmatpush1.bf16.msra.mxu0 %v206
    %227 = vmatprep.subr.bf16.mxu0 0
    %228 = vmatpush1.bf16.msra.mxu0 %v207
    %229 = vmatprep.subr.bf16.mxu0 0
    %230 = vmatpush1.bf16.msra.mxu0 %v208
    %231 = vmatprep.subr.bf16.mxu0 0
    %232 = vmatpush1.bf16.msra.mxu0 %v209
    %233 = vmatprep.subr.bf16.mxu0 0
    %234 = vmatpush1.bf16.msra.mxu0 %v210
    %235 = vmatprep.subr.bf16.mxu0 0
    %236 = vmatpush1.bf16.msra.mxu0 0
    %237 = vmatprep.subr.bf16.mxu0 0
    %238 = vmatpush1.bf16.msra.mxu0 0
    %239 = vmatprep.subr.bf16.mxu0 0
    %240 = vmatpush1.bf16.msra.mxu0 0
    %241 = vmatprep.subr.bf16.mxu0 0
    %242 = vmatpush1.bf16.msra.mxu0 0
    %243 = vmatprep.subr.bf16.mxu0 0
    %244 = vmatpush1.bf16.msra.mxu0 0
    %245 = vmatprep.subr.bf16.mxu0 0
    %246 = vmatpush1.bf16.msra.mxu0 0
    %247 = vmatprep.subr.bf16.mxu0 0
    %248 = vmatpush1.bf16.msra.mxu0 0
    %249 = vmatprep.subr.bf16.mxu0 0
    %250 = vmatpush1.bf16.msra.mxu0 0
    %251 = vmatprep.mubr.bf16.mxu0 0
    %252 = vmatmul.mubr.bf16.gmra.mrb[0].mxu0 %v147
    %v253 = vpop.f32.mrb[0].mxu0
    %v254 = vadd.f32 %v169, %v253
    %v255 = vpop.f32.mrb[0].mxu0
    %v256 = vpop.f32.mrb[0].mxu0
    %v257 = vadd.f32 %v169, %v256
    %v258 = vpop.f32.mrb[0].mxu0
    %259 = vdwg.mxu0
    %v260 = vmax.f32 %v254, 0.0
    %v261 = vmax.f32 %v257, 0.0
    %v262 = vpack.c.bf16 %v261, %v260
    %v263 = vld [vmem:[#allocation6] sm:$0xf]
    %v264 = vld [vmem:[#allocation6 + $0x4] sm:$0xf]
    %v265 = vld [vmem:[#allocation6 + $0x8] sm:$0xf]
    %v266 = vld [vmem:[#allocation6 + $0xc] sm:$0xf]
    %v267 = vld [vmem:[#allocation6 + $0x10] sm:$0xf]
    %v268 = vld [vmem:[#allocation6 + $0x14] sm:$0xf]
    %v269 = vld [vmem:[#allocation6 + $0x18] sm:$0xf]
    %v270 = vld [vmem:[#allocation6 + $0x1c] sm:$0xf]
    %v271 = vld [vmem:[#allocation6 + $0x20] sm:$0xf]
    %v272 = vld [vmem:[#allocation6 + $0x24] sm:$0xf]
    %v273 = vld [vmem:[#allocation6 + $0x28] sm:$0xf]
    %v274 = vld [vmem:[#allocation6 + $0x2c] sm:$0xf]
    %v275 = vld [vmem:[#allocation6 + $0x30] sm:$0xf]
    %v276 = vld [vmem:[#allocation6 + $0x34] sm:$0xf]
    %v277 = vld [vmem:[#allocation6 + $0x38] sm:$0xf]
    %v278 = vld [vmem:[#allocation6 + $0x3c] sm:$0xf]
    %v279 = vld [vmem:[%s6] sm:$0x1]
    %v281 = vlaneseq
    %v282 = vshrl.u32 %v281, 7
    %v283 = vsub.s32 0, %v282
    %v284 = vrot.slane %v279, %v283
    %v302 = vunpack.c.l.b16 %v263
    %v303 = vunpack.c.l.b16 %v264
    %v304 = vunpack.c.l.b16 %v265
    %v305 = vunpack.c.l.b16 %v266
    %v306 = vunpack.c.l.b16 %v267
    %v307 = vunpack.c.l.b16 %v268
    %v308 = vunpack.c.l.b16 %v269
    %v309 = vunpack.c.l.b16 %v270
    %v310 = vunpack.c.l.b16 %v271
    %v311 = vunpack.c.l.b16 %v272
    %v312 = vunpack.c.l.b16 %v273
    %v313 = vunpack.c.l.b16 %v274
    %v314 = vunpack.c.l.b16 %v275
    %v315 = vunpack.c.l.b16 %v276
    %v316 = vunpack.c.l.b16 %v277
    %v317 = vunpack.c.l.b16 %v278
    %v318 = vpack.c.b16 %v303, %v302
    %v319 = vpack.c.b16 %v305, %v304
    %v320 = vpack.c.b16 %v307, %v306
    %v321 = vpack.c.b16 %v309, %v308
    %v322 = vpack.c.b16 %v311, %v310
    %v323 = vpack.c.b16 %v313, %v312
    %v324 = vpack.c.b16 %v315, %v314
    %v325 = vpack.c.b16 %v317, %v316
    %334 = vmatprep.subr.bf16.mxu0 0
    %335 = vmatpush1.bf16.msra.mxu0 %v318
    %336 = vmatprep.subr.bf16.mxu0 0
    %337 = vmatpush1.bf16.msra.mxu0 %v319
    %338 = vmatprep.subr.bf16.mxu0 0
    %339 = vmatpush1.bf16.msra.mxu0 %v320
    %340 = vmatprep.subr.bf16.mxu0 0
    %341 = vmatpush1.bf16.msra.mxu0 %v321
    %342 = vmatprep.subr.bf16.mxu0 0
    %343 = vmatpush1.bf16.msra.mxu0 %v322
    %344 = vmatprep.subr.bf16.mxu0 0
    %345 = vmatpush1.bf16.msra.mxu0 %v323
    %346 = vmatprep.subr.bf16.mxu0 0
    %347 = vmatpush1.bf16.msra.mxu0 %v324
    %348 = vmatprep.subr.bf16.mxu0 0
    %349 = vmatpush1.bf16.msra.mxu0 %v325
    %350 = vmatprep.subr.bf16.mxu0 0
    %351 = vmatpush1.bf16.msra.mxu0 0
    %352 = vmatprep.subr.bf16.mxu0 0
    %353 = vmatpush1.bf16.msra.mxu0 0
    %354 = vmatprep.subr.bf16.mxu0 0
    %355 = vmatpush1.bf16.msra.mxu0 0
    %356 = vmatprep.subr.bf16.mxu0 0
    %357 = vmatpush1.bf16.msra.mxu0 0
    %358 = vmatprep.subr.bf16.mxu0 0
    %359 = vmatpush1.bf16.msra.mxu0 0
    %360 = vmatprep.subr.bf16.mxu0 0
    %361 = vmatpush1.bf16.msra.mxu0 0
    %362 = vmatprep.subr.bf16.mxu0 0
    %363 = vmatpush1.bf16.msra.mxu0 0
    %364 = vmatprep.subr.bf16.mxu0 0
    %365 = vmatpush1.bf16.msra.mxu0 0
    %366 = vmatprep.mubr.bf16.mxu0 0
    %367 = vmatmul.mubr.bf16.gmra.mrb[0].mxu0 %v262
    %v368 = vpop.f32.mrb[0].mxu0
    %v369 = vadd.f32 %v284, %v368
    %v370 = vpop.f32.mrb[0].mxu0
    %v371 = vpop.f32.mrb[0].mxu0
    %v372 = vadd.f32 %v284, %v371
    %v373 = vpop.f32.mrb[0].mxu0
    %374 = vdwg.mxu0
    %v375 = vmax.f32 %v369, 0.0
    %v376 = vmax.f32 %v372, 0.0
    %v377 = vpack.c.bf16 %v376, %v375
    %v378 = vld [vmem:[%s7] sm:$0xf]
    %v379 = vld [vmem:[%s7 + $0x4] sm:$0xf]
    %v380 = vld [vmem:[%s7 + $0x8] sm:$0xf]
    %v381 = vld [vmem:[%s7 + $0xc] sm:$0xf]
    %v382 = vld [vmem:[%s7 + $0x10] sm:$0xf]
    %v383 = vld [vmem:[%s7 + $0x14] sm:$0xf]
    %v384 = vld [vmem:[%s7 + $0x18] sm:$0xf]
    %v385 = vld [vmem:[%s7 + $0x1c] sm:$0xf]
    %v386 = vld [vmem:[%s7 + $0x20] sm:$0xf]
    %v387 = vld [vmem:[%s7 + $0x24] sm:$0xf]
    %v388 = vld [vmem:[%s7 + $0x28] sm:$0xf]
    %v389 = vld [vmem:[%s7 + $0x2c] sm:$0xf]
    %v390 = vld [vmem:[%s7 + $0x30] sm:$0xf]
    %v391 = vld [vmem:[%s7 + $0x34] sm:$0xf]
    %v392 = vld [vmem:[%s7 + $0x38] sm:$0xf]
    %v393 = vld [vmem:[%s7 + $0x3c] sm:$0xf]
    %v394 = vld [vmem:[%s8] sm:$0x1]
    %v396 = vlaneseq
    %v397 = vshrl.u32 %v396, 7
    %v398 = vsub.s32 0, %v397
    %v399 = vrot.slane %v394, %v398
    %v417 = vunpack.c.l.b16 %v378
    %v418 = vunpack.c.l.b16 %v379
    %v419 = vunpack.c.l.b16 %v380
    %v420 = vunpack.c.l.b16 %v381
    %v421 = vunpack.c.l.b16 %v382
    %v422 = vunpack.c.l.b16 %v383
    %v423 = vunpack.c.l.b16 %v384
    %v424 = vunpack.c.l.b16 %v385
    %v425 = vunpack.c.l.b16 %v386
    %v426 = vunpack.c.l.b16 %v387
    %v427 = vunpack.c.l.b16 %v388
    %v428 = vunpack.c.l.b16 %v389
    %v429 = vunpack.c.l.b16 %v390
    %v430 = vunpack.c.l.b16 %v391
    %v431 = vunpack.c.l.b16 %v392
    %v432 = vunpack.c.l.b16 %v393
    %v433 = vpack.c.b16 %v418, %v417
    %v434 = vpack.c.b16 %v420, %v419
    %v435 = vpack.c.b16 %v422, %v421
    %v436 = vpack.c.b16 %v424, %v423
    %v437 = vpack.c.b16 %v426, %v425
    %v438 = vpack.c.b16 %v428, %v427
    %v439 = vpack.c.b16 %v430, %v429
    %v440 = vpack.c.b16 %v432, %v431
    %449 = vmatprep.subr.bf16.mxu0 0
    %450 = vmatpush1.bf16.msra.mxu0 %v433
    %451 = vmatprep.subr.bf16.mxu0 0
    %452 = vmatpush1.bf16.msra.mxu0 %v434
    %453 = vmatprep.subr.bf16.mxu0 0
    %454 = vmatpush1.bf16.msra.mxu0 %v435
    %455 = vmatprep.subr.bf16.mxu0 0
    %456 = vmatpush1.bf16.msra.mxu0 %v436
    %457 = vmatprep.subr.bf16.mxu0 0
    %458 = vmatpush1.bf16.msra.mxu0 %v437
    %459 = vmatprep.subr.bf16.mxu0 0
    %460 = vmatpush1.bf16.msra.mxu0 %v438
    %461 = vmatprep.subr.bf16.mxu0 0
    %462 = vmatpush1.bf16.msra.mxu0 %v439
    %463 = vmatprep.subr.bf16.mxu0 0
    %464 = vmatpush1.bf16.msra.mxu0 %v440
    %465 = vmatprep.subr.bf16.mxu0 0
    %466 = vmatpush1.bf16.msra.mxu0 0
    %467 = vmatprep.subr.bf16.mxu0 0
    %468 = vmatpush1.bf16.msra.mxu0 0
    %469 = vmatprep.subr.bf16.mxu0 0
    %470 = vmatpush1.bf16.msra.mxu0 0
    %471 = vmatprep.subr.bf16.mxu0 0
    %472 = vmatpush1.bf16.msra.mxu0 0
    %473 = vmatprep.subr.bf16.mxu0 0
    %474 = vmatpush1.bf16.msra.mxu0 0
    %475 = vmatprep.subr.bf16.mxu0 0
    %476 = vmatpush1.bf16.msra.mxu0 0
    %477 = vmatprep.subr.bf16.mxu0 0
    %478 = vmatpush1.bf16.msra.mxu0 0
    %479 = vmatprep.subr.bf16.mxu0 0
    %480 = vmatpush1.bf16.msra.mxu0 0
    %481 = vmatprep.mubr.bf16.mxu0 0
    %482 = vmatmul.mubr.bf16.gmra.mrb[0].mxu0 %v377
    %v483 = vpop.f32.mrb[0].mxu0
    %v484 = vadd.f32 %v399, %v483
    %v485 = vpop.f32.mrb[0].mxu0
    %v486 = vpop.f32.mrb[0].mxu0
    %v487 = vadd.f32 %v399, %v486
    %v488 = vpop.f32.mrb[0].mxu0
    %489 = vdwg.mxu0
    %vm490 = vcmask 130048
    %491 = vst.msk [vmem:[%s9] sm:$0xff] %vm490, %v484
    %492 = vst.msk [vmem:[%s9 + $0x8] sm:$0xff] %vm490, %v487
    // Predicated region
    $region50: #{simple_nn_forward.1} parent=1 // pred_check
      _
    $region51: #{simple_nn_forward.1} parent=1 // pred_check_branch
      %494 = sbr.rel (0) target = $region53
    $region52: #{simple_nn_forward.1} parent=1 // pred_region
      _
    $region53: #{simple_nn_forward.1} parent=1 // pred_fallthru
      _
    // Predicated region
    $region54: #{simple_nn_forward.1} parent=1 // pred_check
      _
    $region55: #{simple_nn_forward.1} parent=1 // pred_check_branch
      %496 = sbr.rel (0) target = $region57
    $region56: #{simple_nn_forward.1} parent=1 // pred_region
      _
    $region57: #{simple_nn_forward.1} parent=1 // pred_fallthru
      _
    %497 = vsyncpa [#allocation3], 1
    %498 = vsyncpa [#allocation5], 1

</llo_original>
